<compile_context>
chip_gen: v5e
topology: v5e:2x2
jax: 0.10.0
libtpu: 0.0.40
codegen_flags: <defaults>
</compile_context>

<pallas_src>
import math

import jax
import jax.numpy as jnp
from jax.experimental import pallas as pl
from jax.experimental.pallas import tpu as pltpu

EPS = 1e-6


def _layernorm_kernel(alpha_ref, bias_ref, x_ref, o_ref):
    # alpha/bias: (1,) scalars in SMEM; x_ref/o_ref: (tile_rows, H) in VMEM.
    alpha = alpha_ref[0]
    bias = bias_ref[0]

    x = x_ref[...].astype(jnp.float32)
    h = x.shape[-1]

    mean = jnp.mean(x, axis=-1, keepdims=True)
    num = x - mean
    # torch.Tensor.std defaults to the UNBIASED estimator (ddof=1); the module
    # squares it back to the unbiased variance before adding eps.
    var = jnp.sum(num * num, axis=-1, keepdims=True) * jnp.float32(1.0 / (h - 1))
    # Fuse alpha into the per-row rsqrt scale: one mul+add per element after.
    scale = alpha * jax.lax.rsqrt(var + jnp.float32(EPS))

    o_ref[...] = (num * scale + bias).astype(o_ref.dtype)


def _choose_tile_rows(rows, h, itemsize):
    """Largest row tile (multiple of 8) fitting a conservative VMEM budget."""
    # Footprint: input + output blocks, each double-buffered => ~4 buffers of
    # tile_rows * h * itemsize bytes.  8 MiB per buffer (~32 MiB total) fits
    # every TPU generation (v7x has only 64 MiB physical VMEM).
    per_buffer_budget = 8 * 1024 * 1024
    max_by_vmem = max(8, (per_buffer_budget // (h * itemsize)) // 8 * 8)

    rows_8 = ((rows + 7) // 8) * 8
    if rows_8 <= max_by_vmem:
        # One block covers the whole array (e.g. the tiny demo shape).
        return rows_8

    # Keep at least ~4 grid steps so v7x's two TensorCores each get >= 2.
    four_way = (((rows_8 + 3) // 4) + 7) // 8 * 8
    return max(8, min(max_by_vmem, four_way))


def layer_normalization(x, alpha, bias, *, tile_rows=None):
    """Pallas implementation of LayernNormalization.forward.

    x: (..., H) array (H > 1). alpha, bias: shape-(1,) scalar parameters.
    """
    orig_shape = x.shape
    h = orig_shape[-1]
    rows = int(math.prod(orig_shape[:-1]))
    x2d = x.reshape(rows, h)
    itemsize = int(x2d.dtype.itemsize)

    if tile_rows is None:
        tile_rows = _choose_tile_rows(rows, h, itemsize)

    grid = (pl.cdiv(rows, tile_rows),)

    # Raise the scoped-VMEM limit to cover the double-buffered tiles plus
    # headroom; capped at 48 MiB so it is still safe on v7x (64 MiB physical).
    tile_bytes = tile_rows * h * max(itemsize, 4)
    vmem_limit = int(min(48 << 20, max(16 << 20, 4 * tile_bytes + (4 << 20))))

    # TODO(synk): for H < 128 the output last dim is lane-sparse (masked
    # stores, 75% of each vreg wasted at H=32); a lane-dense transposed layout
    # would help such small-H models but typical transformer H (>=512,
    # multiple of 128) is already lane-dense, so keep the simple layout.
    out = pl.pallas_call(
        _layernorm_kernel,
        out_shape=jax.ShapeDtypeStruct((rows, h), x.dtype),
        grid=grid,
        in_specs=[
            pl.BlockSpec(memory_space=pltpu.MemorySpace.SMEM),   # alpha
            pl.BlockSpec(memory_space=pltpu.MemorySpace.SMEM),   # bias
            pl.BlockSpec((tile_rows, h), lambda i: (i, 0)),      # x tile
        ],
        out_specs=pl.BlockSpec((tile_rows, h), lambda i: (i, 0)),
        compiler_params=pltpu.CompilerParams(
            dimension_semantics=("parallel",),
            vmem_limit_bytes=vmem_limit,
        ),
    )(alpha.astype(jnp.float32), bias.astype(jnp.float32), x2d)

    return out.reshape(orig_shape)


def _reference(x, alpha, bias):
    mean = jnp.mean(x, axis=-1, keepdims=True)
    num = x - mean
    var = jnp.sum(num * num, axis=-1, keepdims=True) / (x.shape[-1] - 1)
    return alpha * num / jnp.sqrt(var + EPS) + bias


if __name__ == "__main__":
    key = jax.random.PRNGKey(0)

    # Deterministic parameter init matching nn.Parameter(torch.ones(1)/zeros(1)).
    alpha = jnp.ones((1,), dtype=jnp.float32)
    bias = jnp.zeros((1,), dtype=jnp.float32)

    # Small transformer-like shape: (batch, seq, hidden).
    B, S, H = 2, 8, 32
    x = jax.random.normal(key, (B, S, H), dtype=jnp.float32)

    y = layer_normalization(x, alpha, bias)
    y = jax.block_until_ready(y)
    y_ref = _reference(x, alpha, bias)
    assert jnp.allclose(y, y_ref, atol=1e-5, rtol=1e-5), "mismatch vs reference"

    # Second small check exercising multiple grid steps + a ragged last block
    # (148 rows with tile_rows=64 -> blocks of 64, 64, 20-valid).
    B2, S2, H2 = 4, 37, 128
    x2 = jax.random.normal(jax.random.PRNGKey(1), (B2, S2, H2), dtype=jnp.float32)
    y2 = layer_normalization(x2, alpha, bias, tile_rows=64)
    y2 = jax.block_until_ready(y2)
    y2_ref = _reference(x2, alpha, bias)
    assert jnp.allclose(y2, y2_ref, atol=1e-5, rtol=1e-5), "ragged-tile mismatch"

    print("KERNEL_OK")
</pallas_src>

<mosaic_0001>
module attributes {stable_mosaic.version = 11 : i64} {
  func.func @_layernorm_kernel(%arg0: i32, %arg1: memref<1xf32, #tpu.memory_space<smem>>, %arg2: memref<1xf32, #tpu.memory_space<smem>>, %arg3: memref<16x32xf32, #tpu.memory_space<vmem>>, %arg4: memref<16x32xf32, #tpu.memory_space<vmem>>) attributes {dimension_semantics = [#tpu.dimension_semantics<parallel>], iteration_bounds = array<i64: 1>, scalar_prefetch = 0 : i64, scratch_operands = 0 : i64, tpu.core_type = #tpu.core_type<tc>, window_params = [{transform_indices = @transform_0, window_bounds = array<i64: 1>}, {transform_indices = @transform_1, window_bounds = array<i64: 1>}, {transform_indices = @transform_2, window_bounds = array<i64: 16, 32>}, {transform_indices = @transform_3, window_bounds = array<i64: 16, 32>}]} {
    %c0 = arith.constant 0 : index
    %0 = memref.load %arg1[%c0] : memref<1xf32, #tpu.memory_space<smem>>
    %c0_0 = arith.constant 0 : index
    %1 = memref.load %arg2[%c0_0] : memref<1xf32, #tpu.memory_space<smem>>
    %c0_1 = arith.constant 0 : index
    %c0_2 = arith.constant 0 : index
    %2 = vector.load %arg3[%c0_1, %c0_2] : memref<16x32xf32, #tpu.memory_space<vmem>>, vector<16x32xf32>
    %cst = arith.constant dense<0.000000e+00> : vector<16xf32>
    %3 = vector.multi_reduction <add>, %2, %cst [1] : vector<16x32xf32> to vector<16xf32>
    %4 = vector.shape_cast %3 : vector<16xf32> to vector<16x1xf32>
    %cst_3 = arith.constant 3.200000e+01 : f32
    %5 = vector.broadcast %cst_3 : f32 to vector<16x1xf32>
    %6 = arith.divf %4, %5 : vector<16x1xf32>
    %7 = vector.broadcast %6 : vector<16x1xf32> to vector<16x32xf32>
    %8 = arith.subf %2, %7 : vector<16x32xf32>
    %9 = arith.mulf %8, %8 : vector<16x32xf32>
    %cst_4 = arith.constant dense<0.000000e+00> : vector<16xf32>
    %10 = vector.multi_reduction <add>, %9, %cst_4 [1] : vector<16x32xf32> to vector<16xf32>
    %11 = vector.shape_cast %10 : vector<16xf32> to vector<16x1xf32>
    %cst_5 = arith.constant 0.0322580636 : f32
    %12 = vector.broadcast %cst_5 : f32 to vector<16x1xf32>
    %13 = arith.mulf %11, %12 : vector<16x1xf32>
    %cst_6 = arith.constant 9.99999997E-7 : f32
    %14 = vector.broadcast %cst_6 : f32 to vector<16x1xf32>
    %15 = arith.addf %13, %14 : vector<16x1xf32>
    %16 = math.rsqrt %15 : vector<16x1xf32>
    %17 = vector.broadcast %0 : f32 to vector<16x1xf32>
    %18 = arith.mulf %17, %16 : vector<16x1xf32>
    %19 = vector.broadcast %18 : vector<16x1xf32> to vector<16x32xf32>
    %20 = arith.mulf %8, %19 : vector<16x32xf32>
    %21 = vector.broadcast %1 : f32 to vector<16x32xf32>
    %22 = arith.addf %20, %21 : vector<16x32xf32>
    %c0_7 = arith.constant 0 : index
    %c0_8 = arith.constant 0 : index
    %23 = vector.load %arg4[%c0_7, %c0_8] : memref<16x32xf32, #tpu.memory_space<vmem>>, vector<16x32xf32>
    tpu.vector_store %arg4[%c0_7, %c0_8], %22 {strides = array<i32>} : memref<16x32xf32, #tpu.memory_space<vmem>>, vector<16x32xf32>,
    return
  }
  func.func @transform_0(%arg0: i32) -> i32 {
    %c0_i32 = arith.constant 0 : i32
    %c0_i32_0 = arith.constant 0 : i32
    return %c0_i32 : i32
  }
  func.func @transform_1(%arg0: i32) -> i32 {
    %c0_i32 = arith.constant 0 : i32
    %c0_i32_0 = arith.constant 0 : i32
    return %c0_i32 : i32
  }
  func.func @transform_2(%arg0: i32) -> (i32, i32) {
    %c0_i32 = arith.constant 0 : i32
    %c0_i32_0 = arith.constant 0 : i32
    return %arg0, %c0_i32 : i32, i32
  }
  func.func @transform_3(%arg0: i32) -> (i32, i32) {
    %c0_i32 = arith.constant 0 : i32
    %c0_i32_0 = arith.constant 0 : i32
    return %arg0, %c0_i32 : i32, i32
  }
}

</mosaic_0001>

<llo_original>
// kernel: tpu_custom_call.1
$region0: #{tpu_custom_call.1}
  #allocation0 [shape = 'u32[]', space=smem, size = 0x4, offset = 0x4, fixed_abs, tag = 'smem constant byte address 0x4 - core index']
  #allocation1 [shape = 'u32[72,128]{1,0:T(1,128)}', space=vmem, size = 0x9000, scoped, tag = 'internal scratch']
  #allocation2 [shape = 'f32[1]{0:T(128)S(6)}', space=smem, size = 0x200, scoped, tag = 'scoped memory for tpu_custom_call.1']
  #allocation3 [shape = 'f32[1]{0:T(128)S(6)}', space=smem, size = 0x200, scoped, tag = 'scoped memory for tpu_custom_call.1']
  %s0 = inlined_call_operand.<no memory space> [shape: f32[1], index: 0, kind: input, shape index: {}]
  %s1 = inlined_call_operand.<no memory space> [shape: f32[1], index: 1, kind: input, shape index: {}]
  %s2 = inlined_call_operand.hbm [shape: f32[16,32], index: 2, kind: input, shape index: {}]
  %s3 = inlined_call_operand.hbm [shape: f32[16,32], index: 3, kind: output, shape index: {}]
  %s4 = sld [smem:[#allocation0]]
  $region26: #{tpu_custom_call.1} parent=0
    _
  %s6 = ssub.s32 1, %s4
  %s7 = scalar_select 0, %s6, %s4
  %8 = sst [smem:[#allocation2]] %s0
  %9 = sst [smem:[#allocation3]] %s1
  $region1: #{tpu_custom_call.1} parent=0
    #allocation4 [shape = 'u8[8192]{0}', space=vmem, size = 0x2000, scoped, tag = 'input window, operand 2, single buffered']
    #allocation5 [shape = 's32[1]{0}', space=sflag, size = 0x4, scoped, tag = 'scoped memory for tpu_custom_call.1']
    #allocation6 [shape = 's32[1]{0}', space=sflag, size = 0x4, scoped, tag = 'scoped memory for tpu_custom_call.1']
    #allocation7 [shape = 'u8[8192]{0}', space=vmem, size = 0x2000, scoped, tag = 'output window, operand 0, single buffered']
    %10 = vsyncpa [#allocation5], 0
    %11 = vsyncpa [#allocation6], 0
    // Predicated region
    $region2: #{tpu_custom_call.1} parent=1 // pred_check
      _
    $region3: #{tpu_custom_call.1} parent=1 // pred_check_branch
      %13 = sbr.rel (0) target = $region5
    $region4: #{tpu_custom_call.1} parent=1 // pred_region
      _
    $region5: #{tpu_custom_call.1} parent=1 // pred_fallthru
      _
    // Predicated region
    $region6: #{tpu_custom_call.1} parent=1 // pred_check
      _
    $region7: #{tpu_custom_call.1} parent=1 // pred_check_branch
      %15 = sbr.rel (0) target = $region9
    $region8: #{tpu_custom_call.1} parent=1 // pred_region
      _
    $region9: #{tpu_custom_call.1} parent=1 // pred_fallthru
      _
    // Predicated region
    $region10: #{tpu_custom_call.1} parent=1 // pred_check
      _
    $region11: #{tpu_custom_call.1} parent=1 // pred_check_branch
      %17 = sbr.rel (0) target = $region13
    $region12: #{tpu_custom_call.1} parent=1 // pred_region
      %19 = vsyncadd [#allocation5], 0
      %s20 = sshll.u32 %s2, 4
      %s21 = int_to_ptr.hbm [resolvable:$true] %s20
      %s22 = sshll.u32 [#allocation4], 4
      %s23 = int_to_ptr.vmem [resolvable:$true] %s22
      %28 = dma.hbm_to_vmem [thread:$0]  %s21, 256, %s23, [#allocation5], 128, 128, 8
    $region13: #{tpu_custom_call.1} parent=1 // pred_fallthru
      _
    // Predicated region
    $region14: #{tpu_custom_call.1} parent=1 // pred_check
      _
    $region15: #{tpu_custom_call.1} parent=1 // pred_check_branch
      %30 = sbr.rel (0) target = $region17
    $region16: #{tpu_custom_call.1} parent=1 // pred_region
      %32 = dma.done [#allocation5], 256
    $region17: #{tpu_custom_call.1} parent=1 // pred_fallthru
      _
    %s33 = sld [smem:[#allocation2]]
    %s34 = sld [smem:[#allocation3]]
    %v35 = vld [vmem:[#allocation4] sm:$0xff]
    %v36 = vld [vmem:[#allocation4 + $0x8] sm:$0xff]
    %vm37 = vcmask 261120
    %v38 = vsel %vm37, %v35, 0.0
    %39 = vadd.xlane.f32.xlu0 %v38
    %v40 = vpop.xlane.xlu0 %39
    %v41 = vsel %vm37, %v36, 0.0
    %42 = vadd.xlane.f32.xlu0 %v41
    %v43 = vpop.xlane.xlu0 %42
    %v44 = vrcp.pop 32.0
    %v45 = vmul.f32 32.0, %v44
    %v46 = vsub.f32 1.0, %v45
    %v47 = vmul.f32 %v44, %v46
    %v48 = vadd.f32 %v44, %v47
    %vm49 = vweird.f32 %v44
    %v50 = vsel %vm49, %v44, %v48
    %v51 = vmul.f32 %v40, %v50
    %v52 = vmul.f32 %v43, %v50
    %v53 = vsub.f32 %v35, %v51
    %v54 = vsub.f32 %v36, %v52
    %v55 = vmul.f32 %v53, %v53
    %v56 = vmul.f32 %v54, %v54
    %v57 = vsel %vm37, %v55, 0.0
    %58 = vadd.xlane.f32.xlu0 %v57
    %v59 = vpop.xlane.xlu0 %58
    %v60 = vsel %vm37, %v56, 0.0
    %61 = vadd.xlane.f32.xlu0 %v60
    %v62 = vpop.xlane.xlu0 %61
    %v63 = vmul.f32 %v59, 0.032258064
    %v64 = vmul.f32 %v62, 0.032258064
    %v65 = vadd.f32 %v63, 1e-06
    %v66 = vadd.f32 %v64, 1e-06
    %v67 = vrsqrt.pop %v65
    %v68 = vmul.f32 %v67, %v65
    %v69 = vmul.f32 %v68, %v67
    %v70 = vmul.f32 0.5, %v69
    %v71 = vsub.f32 1.5, %v70
    %v72 = vmul.f32 %v67, %v71
    %vm73 = vweird.f32 %v65
    %vm74 = vweird.f32 %v67
    %vm75 = vmor %vm73, %vm74
    %v76 = vsel %vm75, %v67, %v72
    %v77 = vrsqrt.pop %v66
    %v78 = vmul.f32 %v77, %v66
    %v79 = vmul.f32 %v78, %v77
    %v80 = vmul.f32 0.5, %v79
    %v81 = vsub.f32 1.5, %v80
    %v82 = vmul.f32 %v77, %v81
    %vm83 = vweird.f32 %v66
    %vm84 = vweird.f32 %v77
    %vm85 = vmor %vm83, %vm84
    %v86 = vsel %vm85, %v77, %v82
    %v87 = vstv %s33
    %v88 = vmul.f32 %v87, %v76
    %v89 = vmul.f32 %v87, %v86
    %v90 = vmul.f32 %v53, %v88
    %v91 = vmul.f32 %v54, %v89
    %v92 = vstv %s34
    %v93 = vadd.f32 %v90, %v92
    %v94 = vadd.f32 %v91, %v92
    %95 = vst.msk [vmem:[#allocation7] sm:$0xff] %vm37, %v93
    %96 = vst.msk [vmem:[#allocation7 + $0x8] sm:$0xff] %vm37, %v94
    // Predicated region
    $region18: #{tpu_custom_call.1} parent=1 // pred_check
      _
    $region19: #{tpu_custom_call.1} parent=1 // pred_check_branch
      %98 = sbr.rel (0) target = $region21
    $region20: #{tpu_custom_call.1} parent=1 // pred_region
      %100 = vsyncadd [#allocation6], 0
      %s101 = sshll.u32 [#allocation7], 4
      %s102 = int_to_ptr.vmem [resolvable:$true] %s101
      %s103 = sshll.u32 %s3, 4
      %s104 = int_to_ptr.hbm [resolvable:$true] %s103
      %109 = dma.vmem_to_hbm [thread:$0]  %s102, 256, %s104, [#allocation6], 128, 128, 8
    $region21: #{tpu_custom_call.1} parent=1 // pred_fallthru
      _
    // Predicated region
    $region22: #{tpu_custom_call.1} parent=1 // pred_check
      _
    $region23: #{tpu_custom_call.1} parent=1 // pred_check_branch
      %111 = sbr.rel (0) target = $region25
    $region24: #{tpu_custom_call.1} parent=1 // pred_region
      %113 = dma.done [#allocation6], 256
    $region25: #{tpu_custom_call.1} parent=1 // pred_fallthru
      _
    %114 = vsyncpa [#allocation5], 1
    %115 = vsyncpa [#allocation6], 1

</llo_original>
